<compile_context>
chip_gen: v7x
topology: tpu7x:2x2x1
jax: 0.10.0
libtpu: 0.0.40
codegen_flags: <defaults>
</compile_context>

<pallas_src>
import jax
import jax.numpy as jnp
from jax import lax
from jax.experimental import pallas as pl
from jax.experimental.pallas import tpu as pltpu


def _qnet_kernel(x_ref, w1_ref, b123_ref, w23_ref, w4_ref, b4_ref, q_ref):
    x = x_ref[...]                                   # [TB, S+A] bf16
    b = b123_ref[...]                                # [3, H]   f32

    # Layer 1: single K=(S+A) MXU pass (concat fused in the wrapper).
    h = jnp.dot(x, w1_ref[...], preferred_element_type=jnp.float32) + b[0:1]
    h = jnp.maximum(h, 0.0).astype(jnp.bfloat16)

    # Layers 2 / 3: resident [H, H] bf16 weights, f32 accumulate, bias+ReLU f32.
    h = jnp.dot(h, w23_ref[0], preferred_element_type=jnp.float32) + b[1:2]
    h = jnp.maximum(h, 0.0).astype(jnp.bfloat16)
    h = jnp.dot(h, w23_ref[1], preferred_element_type=jnp.float32) + b[2:3]
    h = jnp.maximum(h, 0.0).astype(jnp.bfloat16)

    # Layer 4: contract the [1, H] fc4 weight row against h over the feature
    # axis (transposed-RHS matmul) -> [1, TB] with batch on lanes.  Explicit
    # dot_general guarantees no materialized transpose of the [TB, H] tile and
    # the store is a full, unmasked 128-lane-multiple vst.
    q = lax.dot_general(w4_ref[...], h,
                        dimension_numbers=(((1,), (1,)), ((), ())),
                        preferred_element_type=jnp.float32)       # [1, TB]
    q_ref[...] = (q + b4_ref[0]).astype(q_ref.dtype)


def _round_up(x, m):
    return (x + m - 1) // m * m


def qnetwork_forward(state, action, params, block_b=256):
    """state: [B, state_dim] f32, action: [B, action_dim] f32 -> q: [B, 1] f32."""
    w1, b123, w23, w4, b4 = params
    B, S = state.shape
    A = action.shape[1]
    H = w23.shape[-1]

    # Fused concat + f32->bf16 cast in the wrapper (tiny HBM cost, one MXU
    # pass and one activation DMA per grid step inside the kernel).
    x = jnp.concatenate([state, action], axis=-1).astype(jnp.bfloat16)

    # Batch tile: multiple of 128, up to block_b (default 256 -> fills the
    # 256-wide MXU row dim on v6e/v7x).  Small batches pad up to one full
    # 128-row tile so bf16 sublane packing and the lane-dense output store
    # are never masked; padded compute is free (overhead-bound kernel).
    block_b = _round_up(max(block_b, 128), 128)
    TB = min(block_b, _round_up(B, 128))
    Bp = _round_up(B, TB)
    if Bp != B:
        x = jnp.pad(x, ((0, Bp - B), (0, 0)))
    n_tiles = Bp // TB

    # Megacore sharding only when there is enough work per core (v7x has 2 TCs;
    # "arbitrary" vs "parallel" is a no-op on v5e/v6e).
    semantics = ("parallel",) if n_tiles >= 4 else ("arbitrary",)

    # Parameters: full-array VMEM blocks with constant index_maps -> fetched
    # once, resident across the batch grid.
    def const_spec(shape):
        return pl.BlockSpec(shape, lambda i: (0,) * len(shape))

    q_slab = pl.pallas_call(
        _qnet_kernel,
        out_shape=jax.ShapeDtypeStruct((n_tiles, TB), jnp.float32),
        grid=(n_tiles,),
        in_specs=[
            pl.BlockSpec((TB, S + A), lambda i: (i, 0)),          # activations
            const_spec((S + A, H)),                               # W1
            const_spec((3, H)),                                   # b1,b2,b3
            const_spec((2, H, H)),                                # W2,W3
            const_spec((1, H)),                                   # W4 row
            pl.BlockSpec(memory_space=pltpu.MemorySpace.SMEM),    # b4 (1,)
        ],
        # Lane-dense output slab: one [1, TB] row per batch tile.
        out_specs=pl.BlockSpec((1, TB), lambda i: (i, 0)),
        compiler_params=pltpu.CompilerParams(dimension_semantics=semantics),
    )(x, w1, b123, w23, w4, b4)

    # (n_tiles, TB) -> (Bp, 1), drop batch padding.
    return q_slab.reshape(Bp, 1)[:B]


def _xavier_uniform(key, in_dim, out_dim):
    # torch.nn.init.xavier_uniform_ on a [out, in] weight; stored transposed as
    # [in, out] (same distribution, gain=1), then cast once to bf16.
    limit = (6.0 / (in_dim + out_dim)) ** 0.5
    w = jax.random.uniform(key, (in_dim, out_dim), jnp.float32, -limit, limit)
    return w.astype(jnp.bfloat16)


def init_qnetwork_params(key, state_dim, action_dim, hidden_dim):
    k1, k2, k3, k4 = jax.random.split(key, 4)
    in_dim = state_dim + action_dim
    w1 = _xavier_uniform(k1, in_dim, hidden_dim)                  # [S+A, H]
    w2 = _xavier_uniform(k2, hidden_dim, hidden_dim)
    w3 = _xavier_uniform(k3, hidden_dim, hidden_dim)
    w23 = jnp.stack([w2, w3], axis=0)                             # [2, H, H]
    # fc4: torch weight is [1, H]; kept as a [1, H] row for the transposed
    # contraction in the kernel.
    limit4 = (6.0 / (hidden_dim + 1)) ** 0.5
    w4 = jax.random.uniform(k4, (1, hidden_dim), jnp.float32,
                            -limit4, limit4).astype(jnp.bfloat16)
    b123 = jnp.zeros((3, hidden_dim), jnp.float32)                # zero biases
    b4 = jnp.zeros((1,), jnp.float32)                             # SMEM scalar
    # TODO(synk): for twin-critic (Q1/Q2) SAC usage, stack both critics' weights
    # on a leading axis and evaluate both heads inside one pallas_call to share
    # the launch / weight-DMA overhead.
    return (w1, b123, w23, w4, b4)


def qnetwork_reference(state, action, params):
    """Pure-JAX reference mirroring the kernel's bf16/f32 numerics."""
    w1, b123, w23, w4, b4 = params
    x = jnp.concatenate([state, action], axis=-1).astype(jnp.bfloat16)
    h = jnp.dot(x, w1, preferred_element_type=jnp.float32) + b123[0:1]
    h = jnp.maximum(h, 0.0).astype(jnp.bfloat16)
    h = jnp.dot(h, w23[0], preferred_element_type=jnp.float32) + b123[1:2]
    h = jnp.maximum(h, 0.0).astype(jnp.bfloat16)
    h = jnp.dot(h, w23[1], preferred_element_type=jnp.float32) + b123[2:3]
    h = jnp.maximum(h, 0.0).astype(jnp.bfloat16)
    q = jnp.einsum('bd,od->bo', h, w4, preferred_element_type=jnp.float32)
    return q + b4[0]


if __name__ == "__main__":
    state_dim, action_dim, hidden_dim = 12, 4, 256   # hidden multiple of 128

    key = jax.random.PRNGKey(0)
    k_params, k_data = jax.random.split(key)
    params = init_qnetwork_params(k_params, state_dim, action_dim, hidden_dim)

    fwd = jax.jit(qnetwork_forward)

    # batch=8: small-batch path padded to one full 128-row tile;
    # batch=200: padded to a single 256-row tile (fewer grid steps, wide MXU M).
    for batch in (8, 200):
        kb = jax.random.fold_in(k_data, batch)
        k_s, k_a = jax.random.split(kb)
        state = jax.random.normal(k_s, (batch, state_dim), jnp.float32)
        action = jax.random.normal(k_a, (batch, action_dim), jnp.float32)

        q = jax.block_until_ready(fwd(state, action, params))
        q_ref = qnetwork_reference(state, action, params)

        assert q.shape == (batch, 1), q.shape
        assert jnp.allclose(q, q_ref, atol=1e-2, rtol=1e-2), \
            float(jnp.max(jnp.abs(q - q_ref)))

    print("KERNEL_OK")
</pallas_src>

<mosaic_0001>
module attributes {stable_mosaic.version = 11 : i64} {
  func.func @_qnet_kernel(%arg0: i32, %arg1: memref<128x16xbf16, #tpu.memory_space<vmem>>, %arg2: memref<16x256xbf16, #tpu.memory_space<vmem>>, %arg3: memref<3x256xf32, #tpu.memory_space<vmem>>, %arg4: memref<2x256x256xbf16, #tpu.memory_space<vmem>>, %arg5: memref<1x256xbf16, #tpu.memory_space<vmem>>, %arg6: memref<1xf32, #tpu.memory_space<smem>>, %arg7: memref<1x128xf32, #tpu.memory_space<vmem>>) attributes {dimension_semantics = [#tpu.dimension_semantics<arbitrary>], iteration_bounds = array<i64: 1>, scalar_prefetch = 0 : i64, scratch_operands = 0 : i64, tpu.core_type = #tpu.core_type<tc>, window_params = [{transform_indices = @transform_0, window_bounds = array<i64: 128, 16>}, {pipeline_mode = #tpu.pipeline_mode<synchronous>, transform_indices = @transform_1, window_bounds = array<i64: 16, 256>}, {pipeline_mode = #tpu.pipeline_mode<synchronous>, transform_indices = @transform_2, window_bounds = array<i64: 3, 256>}, {pipeline_mode = #tpu.pipeline_mode<synchronous>, transform_indices = @transform_3, window_bounds = array<i64: 2, 256, 256>}, {pipeline_mode = #tpu.pipeline_mode<synchronous>, transform_indices = @transform_4, window_bounds = array<i64: 1, 256>}, {transform_indices = @transform_5, window_bounds = array<i64: 1>}, {transform_indices = @transform_6, window_bounds = array<i64: 1, 128>}]} {
    %c0 = arith.constant 0 : index
    %c0_0 = arith.constant 0 : index
    %0 = vector.load %arg1[%c0, %c0_0] : memref<128x16xbf16, #tpu.memory_space<vmem>>, vector<128x16xbf16>
    %c0_1 = arith.constant 0 : index
    %c0_2 = arith.constant 0 : index
    %1 = vector.load %arg3[%c0_1, %c0_2] : memref<3x256xf32, #tpu.memory_space<vmem>>, vector<3x256xf32>
    %c0_3 = arith.constant 0 : index
    %c0_4 = arith.constant 0 : index
    %2 = vector.load %arg2[%c0_3, %c0_4] : memref<16x256xbf16, #tpu.memory_space<vmem>>, vector<16x256xbf16>
    %cst = arith.constant dense<0.000000e+00> : vector<128x256xf32>
    %3 = tpu.matmul %0, %2, %cst {dimension_numbers = #tpu.dot_dimension_numbers<[1], [0], [0], [1], [0, 0, 1, 1], [], []>} : vector<128x16xbf16>, vector<16x256xbf16>, vector<128x256xf32> -> vector<128x256xf32>
    %4 = vector.extract_strided_slice %1 {offsets = [0, 0], sizes = [1, 256], strides = [1, 1]} : vector<3x256xf32> to vector<1x256xf32>
    %5 = vector.broadcast %4 : vector<1x256xf32> to vector<128x256xf32>
    %6 = arith.addf %3, %5 : vector<128x256xf32>
    %cst_5 = arith.constant 0.000000e+00 : f32
    %7 = vector.broadcast %cst_5 : f32 to vector<128x256xf32>
    %8 = arith.maximumf %6, %7 : vector<128x256xf32>
    %9 = arith.truncf %8 : vector<128x256xf32> to vector<128x256xbf16>
    %c0_6 = arith.constant 0 : index
    %c0_7 = arith.constant 0 : index
    %c0_8 = arith.constant 0 : index
    %10 = vector.load %arg4[%c0_6, %c0_7, %c0_8] : memref<2x256x256xbf16, #tpu.memory_space<vmem>>, vector<1x256x256xbf16>
    %11 = vector.shape_cast %10 : vector<1x256x256xbf16> to vector<256x256xbf16>
    %cst_9 = arith.constant dense<0.000000e+00> : vector<128x256xf32>
    %12 = tpu.matmul %9, %11, %cst_9 {dimension_numbers = #tpu.dot_dimension_numbers<[1], [0], [0], [1], [0, 0, 1, 1], [], []>} : vector<128x256xbf16>, vector<256x256xbf16>, vector<128x256xf32> -> vector<128x256xf32>
    %13 = vector.extract_strided_slice %1 {offsets = [1, 0], sizes = [1, 256], strides = [1, 1]} : vector<3x256xf32> to vector<1x256xf32>
    %14 = vector.broadcast %13 : vector<1x256xf32> to vector<128x256xf32>
    %15 = arith.addf %12, %14 : vector<128x256xf32>
    %cst_10 = arith.constant 0.000000e+00 : f32
    %16 = vector.broadcast %cst_10 : f32 to vector<128x256xf32>
    %17 = arith.maximumf %15, %16 : vector<128x256xf32>
    %18 = arith.truncf %17 : vector<128x256xf32> to vector<128x256xbf16>
    %c1 = arith.constant 1 : index
    %c0_11 = arith.constant 0 : index
    %c0_12 = arith.constant 0 : index
    %19 = vector.load %arg4[%c1, %c0_11, %c0_12] : memref<2x256x256xbf16, #tpu.memory_space<vmem>>, vector<1x256x256xbf16>
    %20 = vector.shape_cast %19 : vector<1x256x256xbf16> to vector<256x256xbf16>
    %cst_13 = arith.constant dense<0.000000e+00> : vector<128x256xf32>
    %21 = tpu.matmul %18, %20, %cst_13 {dimension_numbers = #tpu.dot_dimension_numbers<[1], [0], [0], [1], [0, 0, 1, 1], [], []>} : vector<128x256xbf16>, vector<256x256xbf16>, vector<128x256xf32> -> vector<128x256xf32>
    %22 = vector.extract_strided_slice %1 {offsets = [2, 0], sizes = [1, 256], strides = [1, 1]} : vector<3x256xf32> to vector<1x256xf32>
    %23 = vector.broadcast %22 : vector<1x256xf32> to vector<128x256xf32>
    %24 = arith.addf %21, %23 : vector<128x256xf32>
    %cst_14 = arith.constant 0.000000e+00 : f32
    %25 = vector.broadcast %cst_14 : f32 to vector<128x256xf32>
    %26 = arith.maximumf %24, %25 : vector<128x256xf32>
    %27 = arith.truncf %26 : vector<128x256xf32> to vector<128x256xbf16>
    %c0_15 = arith.constant 0 : index
    %c0_16 = arith.constant 0 : index
    %28 = vector.load %arg5[%c0_15, %c0_16] : memref<1x256xbf16, #tpu.memory_space<vmem>>, vector<1x256xbf16>
    %cst_17 = arith.constant dense<0.000000e+00> : vector<1x128xf32>
    %29 = tpu.matmul %28, %27, %cst_17 {dimension_numbers = #tpu.dot_dimension_numbers<[1], [1], [0], [0], [0, 0, 1, 0], [], []>} : vector<1x256xbf16>, vector<128x256xbf16>, vector<1x128xf32> -> vector<1x128xf32>
    %c0_18 = arith.constant 0 : index
    %30 = memref.load %arg6[%c0_18] : memref<1xf32, #tpu.memory_space<smem>>
    %31 = vector.broadcast %30 : f32 to vector<1x128xf32>
    %32 = arith.addf %29, %31 : vector<1x128xf32>
    %c0_19 = arith.constant 0 : index
    %c0_20 = arith.constant 0 : index
    %33 = vector.load %arg7[%c0_19, %c0_20] : memref<1x128xf32, #tpu.memory_space<vmem>>, vector<1x128xf32>
    tpu.vector_store %arg7[%c0_19, %c0_20], %32 {strides = array<i32>} : memref<1x128xf32, #tpu.memory_space<vmem>>, vector<1x128xf32>,
    return
  }
  func.func @transform_0(%arg0: i32) -> (i32, i32) {
    %c0_i32 = arith.constant 0 : i32
    %c0_i32_0 = arith.constant 0 : i32
    return %arg0, %c0_i32 : i32, i32
  }
  func.func @transform_1(%arg0: i32) -> (i32, i32) {
    %c0_i32 = arith.constant 0 : i32
    %c0_i32_0 = arith.constant 0 : i32
    %c0_i32_1 = arith.constant 0 : i32
    return %c0_i32, %c0_i32_0 : i32, i32
  }
  func.func @transform_2(%arg0: i32) -> (i32, i32) {
    %c0_i32 = arith.constant 0 : i32
    %c0_i32_0 = arith.constant 0 : i32
    %c0_i32_1 = arith.constant 0 : i32
    return %c0_i32, %c0_i32_0 : i32, i32
  }
  func.func @transform_3(%arg0: i32) -> (i32, i32, i32) {
    %c0_i32 = arith.constant 0 : i32
    %c0_i32_0 = arith.constant 0 : i32
    %c0_i32_1 = arith.constant 0 : i32
    %c0_i32_2 = arith.constant 0 : i32
    return %c0_i32, %c0_i32_0, %c0_i32_1 : i32, i32, i32
  }
  func.func @transform_4(%arg0: i32) -> (i32, i32) {
    %c0_i32 = arith.constant 0 : i32
    %c0_i32_0 = arith.constant 0 : i32
    %c0_i32_1 = arith.constant 0 : i32
    return %c0_i32, %c0_i32_0 : i32, i32
  }
  func.func @transform_5(%arg0: i32) -> i32 {
    %c0_i32 = arith.constant 0 : i32
    %c0_i32_0 = arith.constant 0 : i32
    return %c0_i32 : i32
  }
  func.func @transform_6(%arg0: i32) -> (i32, i32) {
    %c0_i32 = arith.constant 0 : i32
    %c0_i32_0 = arith.constant 0 : i32
    return %arg0, %c0_i32 : i32, i32
  }
}

</mosaic_0001>

<llo_original>
// kernel: qnetwork_forward.1
$region0: #{qnetwork_forward.1}
  #allocation0 [shape = 'u32[]', space=smem, size = 0x4, offset = 0x4, fixed_abs, tag = 'smem constant byte address 0x4 - core index']
  #allocation1 [shape = 'u32[144,128]{1,0:T(1,128)}', space=vmem, size = 0x12000, scoped, tag = 'internal scratch']
  #allocation2 [shape = 'f32[1]{0:T(128)S(6)}', space=smem, size = 0x200, scoped, tag = 'scoped memory for qnetwork_forward.1']
  %s0 = inlined_call_operand.vmem [shape: bf16[128,16], index: 0, kind: input, shape index: {}]
  %s1 = inlined_call_operand.vmem [shape: bf16[16,256], index: 1, kind: input, shape index: {}]
  %s2 = inlined_call_operand.vmem [shape: f32[3,256], index: 2, kind: input, shape index: {}]
  %s3 = inlined_call_operand.hbm [shape: bf16[2,256,256], index: 3, kind: input, shape index: {}]
  %s4 = inlined_call_operand.vmem [shape: bf16[1,256], index: 4, kind: input, shape index: {}]
  %s5 = inlined_call_operand.<no memory space> [shape: f32[1], index: 5, kind: input, shape index: {}]
  %s6 = inlined_call_operand.vmem [shape: f32[1,128], index: 6, kind: output, shape index: {}]
  %s7 = sld [smem:[#allocation0]]
  $region38: #{qnetwork_forward.1} parent=0
    _
  %s9 = ssub.s32 1, %s7
  %s10 = scalar_select 0, %s9, %s7
  %11 = sst [smem:[#allocation2]] %s5
  $region1: #{qnetwork_forward.1} parent=0
    #allocation3 [shape = 'u8[262144]{0}', space=vmem, size = 0x40000, scoped, tag = 'input window, operand 3, single buffered']
    #allocation4 [shape = 's32[1]{0}', space=sflag, size = 0x4, scoped, tag = 'scoped memory for qnetwork_forward.1']
    %12 = vsyncpa [#allocation4], 0
    // Predicated region
    $region2: #{qnetwork_forward.1} parent=1 // pred_check
      _
    $region3: #{qnetwork_forward.1} parent=1 // pred_check_branch
      %14 = sbr.rel (0) target = $region5
    $region4: #{qnetwork_forward.1} parent=1 // pred_region
      _
    $region5: #{qnetwork_forward.1} parent=1 // pred_fallthru
      _
    // Predicated region
    $region6: #{qnetwork_forward.1} parent=1 // pred_check
      _
    $region7: #{qnetwork_forward.1} parent=1 // pred_check_branch
      %16 = sbr.rel (0) target = $region9
    $region8: #{qnetwork_forward.1} parent=1 // pred_region
      _
    $region9: #{qnetwork_forward.1} parent=1 // pred_fallthru
      _
    // Predicated region
    $region10: #{qnetwork_forward.1} parent=1 // pred_check
      _
    $region11: #{qnetwork_forward.1} parent=1 // pred_check_branch
      %18 = sbr.rel (0) target = $region13
    $region12: #{qnetwork_forward.1} parent=1 // pred_region
      _
    $region13: #{qnetwork_forward.1} parent=1 // pred_fallthru
      _
    // Predicated region
    $region14: #{qnetwork_forward.1} parent=1 // pred_check
      _
    $region15: #{qnetwork_forward.1} parent=1 // pred_check_branch
      %20 = sbr.rel (0) target = $region17
    $region16: #{qnetwork_forward.1} parent=1 // pred_region
      %s22 = ssub.s32 8192, 8192
      %23 = vsyncadd [#allocation4], %s22
      %s24 = sshll.u32 [#allocation3], 4
      %s25 = int_to_ptr.vmem [resolvable:$true] %s24
      %30 = dma.hbm_to_vmem [thread:$0]  %s3, 8192, %s25, [#allocation4], 128, 128, 8
    $region17: #{qnetwork_forward.1} parent=1 // pred_fallthru
      _
    // Predicated region
    $region18: #{qnetwork_forward.1} parent=1 // pred_check
      _
    $region19: #{qnetwork_forward.1} parent=1 // pred_check_branch
      %32 = sbr.rel (0) target = $region21
    $region20: #{qnetwork_forward.1} parent=1 // pred_region
      _
    $region21: #{qnetwork_forward.1} parent=1 // pred_fallthru
      _
    // Predicated region
    $region22: #{qnetwork_forward.1} parent=1 // pred_check
      _
    $region23: #{qnetwork_forward.1} parent=1 // pred_check_branch
      %34 = sbr.rel (0) target = $region25
    $region24: #{qnetwork_forward.1} parent=1 // pred_region
      _
    $region25: #{qnetwork_forward.1} parent=1 // pred_fallthru
      _
    // Predicated region
    $region26: #{qnetwork_forward.1} parent=1 // pred_check
      _
    $region27: #{qnetwork_forward.1} parent=1 // pred_check_branch
      %36 = sbr.rel (0) target = $region29
    $region28: #{qnetwork_forward.1} parent=1 // pred_region
      %37 = dma.done [#allocation4], 8192
    $region29: #{qnetwork_forward.1} parent=1 // pred_fallthru
      _
    %v39 = vld [vmem:[%s0] sm:$0xf]
    %v40 = vld [vmem:[%s0 + $0x4] sm:$0xf]
    %v41 = vld [vmem:[%s0 + $0x8] sm:$0xf]
    %v42 = vld [vmem:[%s0 + $0xc] sm:$0xf]
    %v43 = vld [vmem:[%s0 + $0x10] sm:$0xf]
    %v44 = vld [vmem:[%s0 + $0x14] sm:$0xf]
    %v45 = vld [vmem:[%s0 + $0x18] sm:$0xf]
    %v46 = vld [vmem:[%s0 + $0x1c] sm:$0xf]
    %v47 = vld [vmem:[%s0 + $0x20] sm:$0xf]
    %v48 = vld [vmem:[%s0 + $0x24] sm:$0xf]
    %v49 = vld [vmem:[%s0 + $0x28] sm:$0xf]
    %v50 = vld [vmem:[%s0 + $0x2c] sm:$0xf]
    %v51 = vld [vmem:[%s0 + $0x30] sm:$0xf]
    %v52 = vld [vmem:[%s0 + $0x34] sm:$0xf]
    %v53 = vld [vmem:[%s0 + $0x38] sm:$0xf]
    %v54 = vld [vmem:[%s0 + $0x3c] sm:$0xf]
    %v55 = vld [vmem:[%s2] sm:$0x77]
    %v56 = vld [vmem:[%s1] sm:$0xff]
    %v57 = vld [vmem:[%s1 + $0x8] sm:$0xff]
    %v59 = vlaneseq
    %v60 = vshrl.u32 %v59, 7
    %v61 = vsub.s32 0, %v60
    %v62 = vrot.slane %v55, %v61
    %v63 = vlaneseq
    %v64 = vshrl.u32 %v63, 7
    %v65 = vsub.s32 4, %v64
    %v66 = vrot.slane %v55, %v65
    %v69 = vlaneseq
    %v70 = vshrl.u32 %v69, 7
    %v71 = vsub.s32 0, %v70
    %v72 = vrot.slane %v62, %v71
    %v73 = vlaneseq
    %v74 = vshrl.u32 %v73, 7
    %v75 = vsub.s32 0, %v74
    %v76 = vrot.slane %v66, %v75
    %v93 = vunpack.c.l.b16 %v39
    %v94 = vunpack.c.l.b16 %v40
    %v95 = vunpack.c.l.b16 %v41
    %v96 = vunpack.c.l.b16 %v42
    %v97 = vunpack.c.l.b16 %v43
    %v98 = vunpack.c.l.b16 %v44
    %v99 = vunpack.c.l.b16 %v45
    %v100 = vunpack.c.l.b16 %v46
    %v101 = vunpack.c.l.b16 %v47
    %v102 = vunpack.c.l.b16 %v48
    %v103 = vunpack.c.l.b16 %v49
    %v104 = vunpack.c.l.b16 %v50
    %v105 = vunpack.c.l.b16 %v51
    %v106 = vunpack.c.l.b16 %v52
    %v107 = vunpack.c.l.b16 %v53
    %v108 = vunpack.c.l.b16 %v54
    %v109 = vpack.c.b16 %v94, %v93
    %v110 = vpack.c.b16 %v96, %v95
    %v111 = vpack.c.b16 %v98, %v97
    %v112 = vpack.c.b16 %v100, %v99
    %v113 = vpack.c.b16 %v102, %v101
    %v114 = vpack.c.b16 %v104, %v103
    %v115 = vpack.c.b16 %v106, %v105
    %v116 = vpack.c.b16 %v108, %v107
    %v119 = vunpack.c.l.b16 %v56
    %v120 = vunpack.c.h.b16 %v56
    %v121 = vunpack.c.l.b16 %v57
    %v122 = vunpack.c.h.b16 %v57
    %v123 = vpack.c.b16 %v121, %v119
    %v124 = vpack.c.b16 %v122, %v120
    %vm127 = vcmask 130048
    %v129 = vsel %vm127, %v109, 0
    %v132 = vsel %vm127, %v110, 0
    %v135 = vsel %vm127, %v111, 0
    %v138 = vsel %vm127, %v112, 0
    %v141 = vsel %vm127, %v113, 0
    %v144 = vsel %vm127, %v114, 0
    %v147 = vsel %vm127, %v115, 0
    %v150 = vsel %vm127, %v116, 0
    %152 = vmatprep.subr.bf16.mxu0 %v124
    %153 = vmatpush1.bf16.msra.mxu0 %v123
    %154 = vmatprep.subr.bf16.mxu0 0
    %155 = vmatpush1.bf16.msra.mxu0 0
    %156 = vmatprep.subr.bf16.mxu0 0
    %157 = vmatpush1.bf16.msra.mxu0 0
    %158 = vmatprep.subr.bf16.mxu0 0
    %159 = vmatpush1.bf16.msra.mxu0 0
    %160 = vmatprep.subr.bf16.mxu0 0
    %161 = vmatpush1.bf16.msra.mxu0 0
    %162 = vmatprep.subr.bf16.mxu0 0
    %163 = vmatpush1.bf16.msra.mxu0 0
    %164 = vmatprep.subr.bf16.mxu0 0
    %165 = vmatpush1.bf16.msra.mxu0 0
    %166 = vmatprep.subr.bf16.mxu0 0
    %167 = vmatpush1.bf16.msra.mxu0 0
    %168 = vmatprep.subr.bf16.mxu0 0
    %169 = vmatpush1.bf16.msra.mxu0 0
    %170 = vmatprep.subr.bf16.mxu0 0
    %171 = vmatpush1.bf16.msra.mxu0 0
    %172 = vmatprep.subr.bf16.mxu0 0
    %173 = vmatpush1.bf16.msra.mxu0 0
    %174 = vmatprep.subr.bf16.mxu0 0
    %175 = vmatpush1.bf16.msra.mxu0 0
    %176 = vmatprep.subr.bf16.mxu0 0
    %177 = vmatpush1.bf16.msra.mxu0 0
    %178 = vmatprep.subr.bf16.mxu0 0
    %179 = vmatpush1.bf16.msra.mxu0 0
    %180 = vmatprep.subr.bf16.mxu0 0
    %181 = vmatpush1.bf16.msra.mxu0 0
    %182 = vmatprep.subr.bf16.mxu0 0
    %183 = vmatpush1.bf16.msra.mxu0 0
    %184 = vmatprep.mubr.bf16.mxu0 0
    %185 = vmatmul.mubr.bf16.gmra.mrb[0].mxu0 %v129
    %v186 = vpop.f32.mrb[0].mxu0
    %v187 = vadd.f32 %v72, %v186
    %v188 = vpop.f32.mrb[0].mxu0
    %v189 = vadd.f32 %v76, %v188
    %v190 = vpop.f32.mrb[0].mxu0
    %v191 = vadd.f32 %v72, %v190
    %v192 = vpop.f32.mrb[0].mxu0
    %v193 = vadd.f32 %v76, %v192
    %194 = vmatprep.mubr.bf16.mxu0 0
    %195 = vmatmul.mubr.bf16.gmra.mrb[0].mxu0 %v132
    %v196 = vpop.f32.mrb[0].mxu0
    %v197 = vadd.f32 %v72, %v196
    %v198 = vpop.f32.mrb[0].mxu0
    %v199 = vadd.f32 %v76, %v198
    %v200 = vpop.f32.mrb[0].mxu0
    %v201 = vadd.f32 %v72, %v200
    %v202 = vpop.f32.mrb[0].mxu0
    %v203 = vadd.f32 %v76, %v202
    %204 = vmatprep.mubr.bf16.mxu0 0
    %205 = vmatmul.mubr.bf16.gmra.mrb[0].mxu0 %v135
    %v206 = vpop.f32.mrb[0].mxu0
    %v207 = vadd.f32 %v72, %v206
    %v208 = vpop.f32.mrb[0].mxu0
    %v209 = vadd.f32 %v76, %v208
    %v210 = vpop.f32.mrb[0].mxu0
    %v211 = vadd.f32 %v72, %v210
    %v212 = vpop.f32.mrb[0].mxu0
    %v213 = vadd.f32 %v76, %v212
    %214 = vmatprep.mubr.bf16.mxu0 0
    %215 = vmatmul.mubr.bf16.gmra.mrb[0].mxu0 %v138
    %v216 = vpop.f32.mrb[0].mxu0
    %v217 = vadd.f32 %v72, %v216
    %v218 = vpop.f32.mrb[0].mxu0
    %v219 = vadd.f32 %v76, %v218
    %v220 = vpop.f32.mrb[0].mxu0
    %v221 = vadd.f32 %v72, %v220
    %v222 = vpop.f32.mrb[0].mxu0
    %v223 = vadd.f32 %v76, %v222
    %224 = vmatprep.mubr.bf16.mxu0 0
    %225 = vmatmul.mubr.bf16.gmra.mrb[0].mxu0 %v141
    %v226 = vpop.f32.mrb[0].mxu0
    %v227 = vadd.f32 %v72, %v226
    %v228 = vpop.f32.mrb[0].mxu0
    %v229 = vadd.f32 %v76, %v228
    %v230 = vpop.f32.mrb[0].mxu0
    %v231 = vadd.f32 %v72, %v230
    %v232 = vpop.f32.mrb[0].mxu0
    %v233 = vadd.f32 %v76, %v232
    %234 = vmatprep.mubr.bf16.mxu0 0
    %235 = vmatmul.mubr.bf16.gmra.mrb[0].mxu0 %v144
    %v236 = vpop.f32.mrb[0].mxu0
    %v237 = vadd.f32 %v72, %v236
    %v238 = vpop.f32.mrb[0].mxu0
    %v239 = vadd.f32 %v76, %v238
    %v240 = vpop.f32.mrb[0].mxu0
    %v241 = vadd.f32 %v72, %v240
    %v242 = vpop.f32.mrb[0].mxu0
    %v243 = vadd.f32 %v76, %v242
    %244 = vmatprep.mubr.bf16.mxu0 0
    %245 = vmatmul.mubr.bf16.gmra.mrb[0].mxu0 %v147
    %v246 = vpop.f32.mrb[0].mxu0
    %v247 = vadd.f32 %v72, %v246
    %v248 = vpop.f32.mrb[0].mxu0
    %v249 = vadd.f32 %v76, %v248
    %v250 = vpop.f32.mrb[0].mxu0
    %v251 = vadd.f32 %v72, %v250
    %v252 = vpop.f32.mrb[0].mxu0
    %v253 = vadd.f32 %v76, %v252
    %254 = vmatprep.mubr.bf16.mxu0 0
    %255 = vmatmul.mubr.bf16.gmra.mrb[0].mxu0 %v150
    %v256 = vpop.f32.mrb[0].mxu0
    %v257 = vadd.f32 %v72, %v256
    %v258 = vpop.f32.mrb[0].mxu0
    %v259 = vadd.f32 %v76, %v258
    %v260 = vpop.f32.mrb[0].mxu0
    %v261 = vadd.f32 %v72, %v260
    %v262 = vpop.f32.mrb[0].mxu0
    %v263 = vadd.f32 %v76, %v262
    %264 = vdwg.mxu0
    %v265 = vmax.f32 %v187, 0.0
    %v266 = vmax.f32 %v189, 0.0
    %v267 = vmax.f32 %v191, 0.0
    %v268 = vmax.f32 %v193, 0.0
    %v269 = vmax.f32 %v197, 0.0
    %v270 = vmax.f32 %v199, 0.0
    %v271 = vmax.f32 %v201, 0.0
    %v272 = vmax.f32 %v203, 0.0
    %v273 = vmax.f32 %v207, 0.0
    %v274 = vmax.f32 %v209, 0.0
    %v275 = vmax.f32 %v211, 0.0
    %v276 = vmax.f32 %v213, 0.0
    %v277 = vmax.f32 %v217, 0.0
    %v278 = vmax.f32 %v219, 0.0
    %v279 = vmax.f32 %v221, 0.0
    %v280 = vmax.f32 %v223, 0.0
    %v281 = vmax.f32 %v227, 0.0
    %v282 = vmax.f32 %v229, 0.0
    %v283 = vmax.f32 %v231, 0.0
    %v284 = vmax.f32 %v233, 0.0
    %v285 = vmax.f32 %v237, 0.0
    %v286 = vmax.f32 %v239, 0.0
    %v287 = vmax.f32 %v241, 0.0
    %v288 = vmax.f32 %v243, 0.0
    %v289 = vmax.f32 %v247, 0.0
    %v290 = vmax.f32 %v249, 0.0
    %v291 = vmax.f32 %v251, 0.0
    %v292 = vmax.f32 %v253, 0.0
    %v293 = vmax.f32 %v257, 0.0
    %v294 = vmax.f32 %v259, 0.0
    %v295 = vmax.f32 %v261, 0.0
    %v296 = vmax.f32 %v263, 0.0
    %v297 = vpack.c.bf16 %v267, %v265
    %v298 = vpack.c.bf16 %v268, %v266
    %v299 = vpack.c.bf16 %v271, %v269
    %v300 = vpack.c.bf16 %v272, %v270
    %v301 = vpack.c.bf16 %v275, %v273
    %v302 = vpack.c.bf16 %v276, %v274
    %v303 = vpack.c.bf16 %v279, %v277
    %v304 = vpack.c.bf16 %v280, %v278
    %v305 = vpack.c.bf16 %v283, %v281
    %v306 = vpack.c.bf16 %v284, %v282
    %v307 = vpack.c.bf16 %v287, %v285
    %v308 = vpack.c.bf16 %v288, %v286
    %v309 = vpack.c.bf16 %v291, %v289
    %v310 = vpack.c.bf16 %v292, %v290
    %v311 = vpack.c.bf16 %v295, %v293
    %v312 = vpack.c.bf16 %v296, %v294
    %v313 = vld [vmem:[#allocation3] sm:$0xff]
    %v314 = vld [vmem:[#allocation3 + $0x8] sm:$0xff]
    %v315 = vld [vmem:[#allocation3 + $0x10] sm:$0xff]
    %v316 = vld [vmem:[#allocation3 + $0x18] sm:$0xff]
    %v317 = vld [vmem:[#allocation3 + $0x20] sm:$0xff]
    %v318 = vld [vmem:[#allocation3 + $0x28] sm:$0xff]
    %v319 = vld [vmem:[#allocation3 + $0x30] sm:$0xff]
    %v320 = vld [vmem:[#allocation3 + $0x38] sm:$0xff]
    %v321 = vld [vmem:[#allocation3 + $0x40] sm:$0xff]
    %v322 = vld [vmem:[#allocation3 + $0x48] sm:$0xff]
    %v323 = vld [vmem:[#allocation3 + $0x50] sm:$0xff]
    %v324 = vld [vmem:[#allocation3 + $0x58] sm:$0xff]
    %v325 = vld [vmem:[#allocation3 + $0x60] sm:$0xff]
    %v326 = vld [vmem:[#allocation3 + $0x68] sm:$0xff]
    %v327 = vld [vmem:[#allocation3 + $0x70] sm:$0xff]
    %v328 = vld [vmem:[#allocation3 + $0x78] sm:$0xff]
    %v329 = vld [vmem:[#allocation3 + $0x80] sm:$0xff]
    %v330 = vld [vmem:[#allocation3 + $0x88] sm:$0xff]
    %v331 = vld [vmem:[#allocation3 + $0x90] sm:$0xff]
    %v332 = vld [vmem:[#allocation3 + $0x98] sm:$0xff]
    %v333 = vld [vmem:[#allocation3 + $0xa0] sm:$0xff]
    %v334 = vld [vmem:[#allocation3 + $0xa8] sm:$0xff]
    %v335 = vld [vmem:[#allocation3 + $0xb0] sm:$0xff]
    %v336 = vld [vmem:[#allocation3 + $0xb8] sm:$0xff]
    %v337 = vld [vmem:[#allocation3 + $0xc0] sm:$0xff]
    %v338 = vld [vmem:[#allocation3 + $0xc8] sm:$0xff]
    %v339 = vld [vmem:[#allocation3 + $0xd0] sm:$0xff]
    %v340 = vld [vmem:[#allocation3 + $0xd8] sm:$0xff]
    %v341 = vld [vmem:[#allocation3 + $0xe0] sm:$0xff]
    %v342 = vld [vmem:[#allocation3 + $0xe8] sm:$0xff]
    %v343 = vld [vmem:[#allocation3 + $0xf0] sm:$0xff]
    %v344 = vld [vmem:[#allocation3 + $0xf8] sm:$0xff]
    %v345 = vlaneseq
    %v346 = vshrl.u32 %v345, 7
    %v347 = vsub.s32 1, %v346
    %v348 = vrot.slane %v55, %v347
    %v349 = vlaneseq
    %v350 = vshrl.u32 %v349, 7
    %v351 = vsub.s32 5, %v350
    %v352 = vrot.slane %v55, %v351
    %v355 = vlaneseq
    %v356 = vshrl.u32 %v355, 7
    %v357 = vsub.s32 1, %v356
    %v358 = vrot.slane %v348, %v357
    %v359 = vlaneseq
    %v360 = vshrl.u32 %v359, 7
    %v361 = vsub.s32 1, %v360
    %v362 = vrot.slane %v352, %v361
    %v395 = vunpack.c.l.b16 %v313
    %v396 = vunpack.c.h.b16 %v313
    %v397 = vunpack.c.l.b16 %v314
    %v398 = vunpack.c.h.b16 %v314
    %v399 = vunpack.c.l.b16 %v315
    %v400 = vunpack.c.h.b16 %v315
    %v401 = vunpack.c.l.b16 %v316
    %v402 = vunpack.c.h.b16 %v316
    %v403 = vunpack.c.l.b16 %v317
    %v404 = vunpack.c.h.b16 %v317
    %v405 = vunpack.c.l.b16 %v318
    %v406 = vunpack.c.h.b16 %v318
    %v407 = vunpack.c.l.b16 %v319
    %v408 = vunpack.c.h.b16 %v319
    %v409 = vunpack.c.l.b16 %v320
    %v410 = vunpack.c.h.b16 %v320
    %v411 = vunpack.c.l.b16 %v321
    %v412 = vunpack.c.h.b16 %v321
    %v413 = vunpack.c.l.b16 %v322
    %v414 = vunpack.c.h.b16 %v322
    %v415 = vunpack.c.l.b16 %v323
    %v416 = vunpack.c.h.b16 %v323
    %v417 = vunpack.c.l.b16 %v324
    %v418 = vunpack.c.h.b16 %v324
    %v419 = vunpack.c.l.b16 %v325
    %v420 = vunpack.c.h.b16 %v325
    %v421 = vunpack.c.l.b16 %v326
    %v422 = vunpack.c.h.b16 %v326
    %v423 = vunpack.c.l.b16 %v327
    %v424 = vunpack.c.h.b16 %v327
    %v425 = vunpack.c.l.b16 %v328
    %v426 = vunpack.c.h.b16 %v328
    %v427 = vunpack.c.l.b16 %v329
    %v428 = vunpack.c.h.b16 %v329
    %v429 = vunpack.c.l.b16 %v330
    %v430 = vunpack.c.h.b16 %v330
    %v431 = vunpack.c.l.b16 %v331
    %v432 = vunpack.c.h.b16 %v331
    %v433 = vunpack.c.l.b16 %v332
    %v434 = vunpack.c.h.b16 %v332
    %v435 = vunpack.c.l.b16 %v333
    %v436 = vunpack.c.h.b16 %v333
    %v437 = vunpack.c.l.b16 %v334
    %v438 = vunpack.c.h.b16 %v334
    %v439 = vunpack.c.l.b16 %v335
    %v440 = vunpack.c.h.b16 %v335
    %v441 = vunpack.c.l.b16 %v336
    %v442 = vunpack.c.h.b16 %v336
    %v443 = vunpack.c.l.b16 %v337
    %v444 = vunpack.c.h.b16 %v337
    %v445 = vunpack.c.l.b16 %v338
    %v446 = vunpack.c.h.b16 %v338
    %v447 = vunpack.c.l.b16 %v339
    %v448 = vunpack.c.h.b16 %v339
    %v449 = vunpack.c.l.b16 %v340
    %v450 = vunpack.c.h.b16 %v340
    %v451 = vunpack.c.l.b16 %v341
    %v452 = vunpack.c.h.b16 %v341
    %v453 = vunpack.c.l.b16 %v342
    %v454 = vunpack.c.h.b16 %v342
    %v455 = vunpack.c.l.b16 %v343
    %v456 = vunpack.c.h.b16 %v343
    %v457 = vunpack.c.l.b16 %v344
    %v458 = vunpack.c.h.b16 %v344
    %v459 = vpack.c.b16 %v397, %v395
    %v460 = vpack.c.b16 %v398, %v396
    %v461 = vpack.c.b16 %v401, %v399
    %v462 = vpack.c.b16 %v402, %v400
    %v463 = vpack.c.b16 %v405, %v403
    %v464 = vpack.c.b16 %v406, %v404
    %v465 = vpack.c.b16 %v409, %v407
    %v466 = vpack.c.b16 %v410, %v408
    %v467 = vpack.c.b16 %v413, %v411
    %v468 = vpack.c.b16 %v414, %v412
    %v469 = vpack.c.b16 %v417, %v415
    %v470 = vpack.c.b16 %v418, %v416
    %v471 = vpack.c.b16 %v421, %v419
    %v472 = vpack.c.b16 %v422, %v420
    %v473 = vpack.c.b16 %v425, %v423
    %v474 = vpack.c.b16 %v426, %v424
    %v475 = vpack.c.b16 %v429, %v427
    %v476 = vpack.c.b16 %v430, %v428
    %v477 = vpack.c.b16 %v433, %v431
    %v478 = vpack.c.b16 %v434, %v432
    %v479 = vpack.c.b16 %v437, %v435
    %v480 = vpack.c.b16 %v438, %v436
    %v481 = vpack.c.b16 %v441, %v439
    %v482 = vpack.c.b16 %v442, %v440
    %v483 = vpack.c.b16 %v445, %v443
    %v484 = vpack.c.b16 %v446, %v444
    %v485 = vpack.c.b16 %v449, %v447
    %v486 = vpack.c.b16 %v450, %v448
    %v487 = vpack.c.b16 %v453, %v451
    %v488 = vpack.c.b16 %v454, %v452
    %v489 = vpack.c.b16 %v457, %v455
    %v490 = vpack.c.b16 %v458, %v456
    %523 = vmatprep.subr.bf16.mxu0 %v460
    %524 = vmatpush1.bf16.msra.mxu0 %v459
    %525 = vmatprep.subr.bf16.mxu0 %v462
    %526 = vmatpush1.bf16.msra.mxu0 %v461
    %527 = vmatprep.subr.bf16.mxu0 %v464
    %528 = vmatpush1.bf16.msra.mxu0 %v463
    %529 = vmatprep.subr.bf16.mxu0 %v466
    %530 = vmatpush1.bf16.msra.mxu0 %v465
    %531 = vmatprep.subr.bf16.mxu0 %v468
    %532 = vmatpush1.bf16.msra.mxu0 %v467
    %533 = vmatprep.subr.bf16.mxu0 %v470
    %534 = vmatpush1.bf16.msra.mxu0 %v469
    %535 = vmatprep.subr.bf16.mxu0 %v472
    %536 = vmatpush1.bf16.msra.mxu0 %v471
    %537 = vmatprep.subr.bf16.mxu0 %v474
    %538 = vmatpush1.bf16.msra.mxu0 %v473
    %539 = vmatprep.subr.bf16.mxu0 %v476
    %540 = vmatpush1.bf16.msra.mxu0 %v475
    %541 = vmatprep.subr.bf16.mxu0 %v478
    %542 = vmatpush1.bf16.msra.mxu0 %v477
    %543 = vmatprep.subr.bf16.mxu0 %v480
    %544 = vmatpush1.bf16.msra.mxu0 %v479
    %545 = vmatprep.subr.bf16.mxu0 %v482
    %546 = vmatpush1.bf16.msra.mxu0 %v481
    %547 = vmatprep.subr.bf16.mxu0 %v484
    %548 = vmatpush1.bf16.msra.mxu0 %v483
    %549 = vmatprep.subr.bf16.mxu0 %v486
    %550 = vmatpush1.bf16.msra.mxu0 %v485
    %551 = vmatprep.subr.bf16.mxu0 %v488
    %552 = vmatpush1.bf16.msra.mxu0 %v487
    %553 = vmatprep.subr.bf16.mxu0 %v490
    %554 = vmatpush1.bf16.msra.mxu0 %v489
    %555 = vmatprep.mubr.bf16.mxu0 %v298
    %556 = vmatmul.mubr.bf16.gmra.mrb[0].mxu0 %v297
    %v557 = vpop.f32.mrb[0].mxu0
    %v558 = vadd.f32 %v358, %v557
    %v559 = vpop.f32.mrb[0].mxu0
    %v560 = vadd.f32 %v362, %v559
    %v561 = vpop.f32.mrb[0].mxu0
    %v562 = vadd.f32 %v358, %v561
    %v563 = vpop.f32.mrb[0].mxu0
    %v564 = vadd.f32 %v362, %v563
    %565 = vmatprep.mubr.bf16.mxu0 %v300
    %566 = vmatmul.mubr.bf16.gmra.mrb[0].mxu0 %v299
    %v567 = vpop.f32.mrb[0].mxu0
    %v568 = vadd.f32 %v358, %v567
    %v569 = vpop.f32.mrb[0].mxu0
    %v570 = vadd.f32 %v362, %v569
    %v571 = vpop.f32.mrb[0].mxu0
    %v572 = vadd.f32 %v358, %v571
    %v573 = vpop.f32.mrb[0].mxu0
    %v574 = vadd.f32 %v362, %v573
    %575 = vmatprep.mubr.bf16.mxu0 %v302
    %576 = vmatmul.mubr.bf16.gmra.mrb[0].mxu0 %v301
    %v577 = vpop.f32.mrb[0].mxu0
    %v578 = vadd.f32 %v358, %v577
    %v579 = vpop.f32.mrb[0].mxu0
    %v580 = vadd.f32 %v362, %v579
    %v581 = vpop.f32.mrb[0].mxu0
    %v582 = vadd.f32 %v358, %v581
    %v583 = vpop.f32.mrb[0].mxu0
    %v584 = vadd.f32 %v362, %v583
    %585 = vmatprep.mubr.bf16.mxu0 %v304
    %586 = vmatmul.mubr.bf16.gmra.mrb[0].mxu0 %v303
    %v587 = vpop.f32.mrb[0].mxu0
    %v588 = vadd.f32 %v358, %v587
    %v589 = vpop.f32.mrb[0].mxu0
    %v590 = vadd.f32 %v362, %v589
    %v591 = vpop.f32.mrb[0].mxu0
    %v592 = vadd.f32 %v358, %v591
    %v593 = vpop.f32.mrb[0].mxu0
    %v594 = vadd.f32 %v362, %v593
    %595 = vmatprep.mubr.bf16.mxu0 %v306
    %596 = vmatmul.mubr.bf16.gmra.mrb[0].mxu0 %v305
    %v597 = vpop.f32.mrb[0].mxu0
    %v598 = vadd.f32 %v358, %v597
    %v599 = vpop.f32.mrb[0].mxu0
    %v600 = vadd.f32 %v362, %v599
    %v601 = vpop.f32.mrb[0].mxu0
    %v602 = vadd.f32 %v358, %v601
    %v603 = vpop.f32.mrb[0].mxu0
    %v604 = vadd.f32 %v362, %v603
    %605 = vmatprep.mubr.bf16.mxu0 %v308
    %606 = vmatmul.mubr.bf16.gmra.mrb[0].mxu0 %v307
    %v607 = vpop.f32.mrb[0].mxu0
    %v608 = vadd.f32 %v358, %v607
    %v609 = vpop.f32.mrb[0].mxu0
    %v610 = vadd.f32 %v362, %v609
    %v611 = vpop.f32.mrb[0].mxu0
    %v612 = vadd.f32 %v358, %v611
    %v613 = vpop.f32.mrb[0].mxu0
    %v614 = vadd.f32 %v362, %v613
    %615 = vmatprep.mubr.bf16.mxu0 %v310
    %616 = vmatmul.mubr.bf16.gmra.mrb[0].mxu0 %v309
    %v617 = vpop.f32.mrb[0].mxu0
    %v618 = vadd.f32 %v358, %v617
    %v619 = vpop.f32.mrb[0].mxu0
    %v620 = vadd.f32 %v362, %v619
    %v621 = vpop.f32.mrb[0].mxu0
    %v622 = vadd.f32 %v358, %v621
    %v623 = vpop.f32.mrb[0].mxu0
    %v624 = vadd.f32 %v362, %v623
    %625 = vmatprep.mubr.bf16.mxu0 %v312
    %626 = vmatmul.mubr.bf16.gmra.mrb[0].mxu0 %v311
    %v627 = vpop.f32.mrb[0].mxu0
    %v628 = vadd.f32 %v358, %v627
    %v629 = vpop.f32.mrb[0].mxu0
    %v630 = vadd.f32 %v362, %v629
    %v631 = vpop.f32.mrb[0].mxu0
    %v632 = vadd.f32 %v358, %v631
    %v633 = vpop.f32.mrb[0].mxu0
    %v634 = vadd.f32 %v362, %v633
    %635 = vdwg.mxu0
    %v636 = vmax.f32 %v558, 0.0
    %v637 = vmax.f32 %v560, 0.0
    %v638 = vmax.f32 %v562, 0.0
    %v639 = vmax.f32 %v564, 0.0
    %v640 = vmax.f32 %v568, 0.0
    %v641 = vmax.f32 %v570, 0.0
    %v642 = vmax.f32 %v572, 0.0
    %v643 = vmax.f32 %v574, 0.0
    %v644 = vmax.f32 %v578, 0.0
    %v645 = vmax.f32 %v580, 0.0
    %v646 = vmax.f32 %v582, 0.0
    %v647 = vmax.f32 %v584, 0.0
    %v648 = vmax.f32 %v588, 0.0
    %v649 = vmax.f32 %v590, 0.0
    %v650 = vmax.f32 %v592, 0.0
    %v651 = vmax.f32 %v594, 0.0
    %v652 = vmax.f32 %v598, 0.0
    %v653 = vmax.f32 %v600, 0.0
    %v654 = vmax.f32 %v602, 0.0
    %v655 = vmax.f32 %v604, 0.0
    %v656 = vmax.f32 %v608, 0.0
    %v657 = vmax.f32 %v610, 0.0
    %v658 = vmax.f32 %v612, 0.0
    %v659 = vmax.f32 %v614, 0.0
    %v660 = vmax.f32 %v618, 0.0
    %v661 = vmax.f32 %v620, 0.0
    %v662 = vmax.f32 %v622, 0.0
    %v663 = vmax.f32 %v624, 0.0
    %v664 = vmax.f32 %v628, 0.0
    %v665 = vmax.f32 %v630, 0.0
    %v666 = vmax.f32 %v632, 0.0
    %v667 = vmax.f32 %v634, 0.0
    %v668 = vpack.c.bf16 %v638, %v636
    %v669 = vpack.c.bf16 %v639, %v637
    %v670 = vpack.c.bf16 %v642, %v640
    %v671 = vpack.c.bf16 %v643, %v641
    %v672 = vpack.c.bf16 %v646, %v644
    %v673 = vpack.c.bf16 %v647, %v645
    %v674 = vpack.c.bf16 %v650, %v648
    %v675 = vpack.c.bf16 %v651, %v649
    %v676 = vpack.c.bf16 %v654, %v652
    %v677 = vpack.c.bf16 %v655, %v653
    %v678 = vpack.c.bf16 %v658, %v656
    %v679 = vpack.c.bf16 %v659, %v657
    %v680 = vpack.c.bf16 %v662, %v660
    %v681 = vpack.c.bf16 %v663, %v661
    %v682 = vpack.c.bf16 %v666, %v664
    %v683 = vpack.c.bf16 %v667, %v665
    %s684 = scalar_lea.vmem [#allocation3], 256
    %v685 = vld [vmem:[%s684] sm:$0xff]
    %v686 = vld [vmem:[%s684 + $0x8] sm:$0xff]
    %v687 = vld [vmem:[%s684 + $0x10] sm:$0xff]
    %v688 = vld [vmem:[%s684 + $0x18] sm:$0xff]
    %v689 = vld [vmem:[%s684 + $0x20] sm:$0xff]
    %v690 = vld [vmem:[%s684 + $0x28] sm:$0xff]
    %v691 = vld [vmem:[%s684 + $0x30] sm:$0xff]
    %v692 = vld [vmem:[%s684 + $0x38] sm:$0xff]
    %v693 = vld [vmem:[%s684 + $0x40] sm:$0xff]
    %v694 = vld [vmem:[%s684 + $0x48] sm:$0xff]
    %v695 = vld [vmem:[%s684 + $0x50] sm:$0xff]
    %v696 = vld [vmem:[%s684 + $0x58] sm:$0xff]
    %v697 = vld [vmem:[%s684 + $0x60] sm:$0xff]
    %v698 = vld [vmem:[%s684 + $0x68] sm:$0xff]
    %v699 = vld [vmem:[%s684 + $0x70] sm:$0xff]
    %v700 = vld [vmem:[%s684 + $0x78] sm:$0xff]
    %v701 = vld [vmem:[%s684 + $0x80] sm:$0xff]
    %v702 = vld [vmem:[%s684 + $0x88] sm:$0xff]
    %v703 = vld [vmem:[%s684 + $0x90] sm:$0xff]
    %v704 = vld [vmem:[%s684 + $0x98] sm:$0xff]
    %v705 = vld [vmem:[%s684 + $0xa0] sm:$0xff]
    %v706 = vld [vmem:[%s684 + $0xa8] sm:$0xff]
    %v707 = vld [vmem:[%s684 + $0xb0] sm:$0xff]
    %v708 = vld [vmem:[%s684 + $0xb8] sm:$0xff]
    %v709 = vld [vmem:[%s684 + $0xc0] sm:$0xff]
    %v710 = vld [vmem:[%s684 + $0xc8] sm:$0xff]
    %v711 = vld [vmem:[%s684 + $0xd0] sm:$0xff]
    %v712 = vld [vmem:[%s684 + $0xd8] sm:$0xff]
    %v713 = vld [vmem:[%s684 + $0xe0] sm:$0xff]
    %v714 = vld [vmem:[%s684 + $0xe8] sm:$0xff]
    %v715 = vld [vmem:[%s684 + $0xf0] sm:$0xff]
    %v716 = vld [vmem:[%s684 + $0xf8] sm:$0xff]
    %v717 = vlaneseq
    %v718 = vshrl.u32 %v717, 7
    %v719 = vsub.s32 2, %v718
    %v720 = vrot.slane %v55, %v719
    %v721 = vlaneseq
    %v722 = vshrl.u32 %v721, 7
    %v723 = vsub.s32 6, %v722
    %v724 = vrot.slane %v55, %v723
    %v727 = vlaneseq
    %v728 = vshrl.u32 %v727, 7
    %v729 = vsub.s32 2, %v728
    %v730 = vrot.slane %v720, %v729
    %v731 = vlaneseq
    %v732 = vshrl.u32 %v731, 7
    %v733 = vsub.s32 2, %v732
    %v734 = vrot.slane %v724, %v733
    %v767 = vunpack.c.l.b16 %v685
    %v768 = vunpack.c.h.b16 %v685
    %v769 = vunpack.c.l.b16 %v686
    %v770 = vunpack.c.h.b16 %v686
    %v771 = vunpack.c.l.b16 %v687
    %v772 = vunpack.c.h.b16 %v687
    %v773 = vunpack.c.l.b16 %v688
    %v774 = vunpack.c.h.b16 %v688
    %v775 = vunpack.c.l.b16 %v689
    %v776 = vunpack.c.h.b16 %v689
    %v777 = vunpack.c.l.b16 %v690
    %v778 = vunpack.c.h.b16 %v690
    %v779 = vunpack.c.l.b16 %v691
    %v780 = vunpack.c.h.b16 %v691
    %v781 = vunpack.c.l.b16 %v692
    %v782 = vunpack.c.h.b16 %v692
    %v783 = vunpack.c.l.b16 %v693
    %v784 = vunpack.c.h.b16 %v693
    %v785 = vunpack.c.l.b16 %v694
    %v786 = vunpack.c.h.b16 %v694
    %v787 = vunpack.c.l.b16 %v695
    %v788 = vunpack.c.h.b16 %v695
    %v789 = vunpack.c.l.b16 %v696
    %v790 = vunpack.c.h.b16 %v696
    %v791 = vunpack.c.l.b16 %v697
    %v792 = vunpack.c.h.b16 %v697
    %v793 = vunpack.c.l.b16 %v698
    %v794 = vunpack.c.h.b16 %v698
    %v795 = vunpack.c.l.b16 %v699
    %v796 = vunpack.c.h.b16 %v699
    %v797 = vunpack.c.l.b16 %v700
    %v798 = vunpack.c.h.b16 %v700
    %v799 = vunpack.c.l.b16 %v701
    %v800 = vunpack.c.h.b16 %v701
    %v801 = vunpack.c.l.b16 %v702
    %v802 = vunpack.c.h.b16 %v702
    %v803 = vunpack.c.l.b16 %v703
    %v804 = vunpack.c.h.b16 %v703
    %v805 = vunpack.c.l.b16 %v704
    %v806 = vunpack.c.h.b16 %v704
    %v807 = vunpack.c.l.b16 %v705
    %v808 = vunpack.c.h.b16 %v705
    %v809 = vunpack.c.l.b16 %v706
    %v810 = vunpack.c.h.b16 %v706
    %v811 = vunpack.c.l.b16 %v707
    %v812 = vunpack.c.h.b16 %v707
    %v813 = vunpack.c.l.b16 %v708
    %v814 = vunpack.c.h.b16 %v708
    %v815 = vunpack.c.l.b16 %v709
    %v816 = vunpack.c.h.b16 %v709
    %v817 = vunpack.c.l.b16 %v710
    %v818 = vunpack.c.h.b16 %v710
    %v819 = vunpack.c.l.b16 %v711
    %v820 = vunpack.c.h.b16 %v711
    %v821 = vunpack.c.l.b16 %v712
    %v822 = vunpack.c.h.b16 %v712
    %v823 = vunpack.c.l.b16 %v713
    %v824 = vunpack.c.h.b16 %v713
    %v825 = vunpack.c.l.b16 %v714
    %v826 = vunpack.c.h.b16 %v714
    %v827 = vunpack.c.l.b16 %v715
    %v828 = vunpack.c.h.b16 %v715
    %v829 = vunpack.c.l.b16 %v716
    %v830 = vunpack.c.h.b16 %v716
    %v831 = vpack.c.b16 %v769, %v767
    %v832 = vpack.c.b16 %v770, %v768
    %v833 = vpack.c.b16 %v773, %v771
    %v834 = vpack.c.b16 %v774, %v772
    %v835 = vpack.c.b16 %v777, %v775
    %v836 = vpack.c.b16 %v778, %v776
    %v837 = vpack.c.b16 %v781, %v779
    %v838 = vpack.c.b16 %v782, %v780
    %v839 = vpack.c.b16 %v785, %v783
    %v840 = vpack.c.b16 %v786, %v784
    %v841 = vpack.c.b16 %v789, %v787
    %v842 = vpack.c.b16 %v790, %v788
    %v843 = vpack.c.b16 %v793, %v791
    %v844 = vpack.c.b16 %v794, %v792
    %v845 = vpack.c.b16 %v797, %v795
    %v846 = vpack.c.b16 %v798, %v796
    %v847 = vpack.c.b16 %v801, %v799
    %v848 = vpack.c.b16 %v802, %v800
    %v849 = vpack.c.b16 %v805, %v803
    %v850 = vpack.c.b16 %v806, %v804
    %v851 = vpack.c.b16 %v809, %v807
    %v852 = vpack.c.b16 %v810, %v808
    %v853 = vpack.c.b16 %v813, %v811
    %v854 = vpack.c.b16 %v814, %v812
    %v855 = vpack.c.b16 %v817, %v815
    %v856 = vpack.c.b16 %v818, %v816
    %v857 = vpack.c.b16 %v821, %v819
    %v858 = vpack.c.b16 %v822, %v820
    %v859 = vpack.c.b16 %v825, %v823
    %v860 = vpack.c.b16 %v826, %v824
    %v861 = vpack.c.b16 %v829, %v827
    %v862 = vpack.c.b16 %v830, %v828
    %895 = vmatprep.subr.bf16.mxu0 %v832
    %896 = vmatpush1.bf16.msra.mxu0 %v831
    %897 = vmatprep.subr.bf16.mxu0 %v834
    %898 = vmatpush1.bf16.msra.mxu0 %v833
    %899 = vmatprep.subr.bf16.mxu0 %v836
    %900 = vmatpush1.bf16.msra.mxu0 %v835
    %901 = vmatprep.subr.bf16.mxu0 %v838
    %902 = vmatpush1.bf16.msra.mxu0 %v837
    %903 = vmatprep.subr.bf16.mxu0 %v840
    %904 = vmatpush1.bf16.msra.mxu0 %v839
    %905 = vmatprep.subr.bf16.mxu0 %v842
    %906 = vmatpush1.bf16.msra.mxu0 %v841
    %907 = vmatprep.subr.bf16.mxu0 %v844
    %908 = vmatpush1.bf16.msra.mxu0 %v843
    %909 = vmatprep.subr.bf16.mxu0 %v846
    %910 = vmatpush1.bf16.msra.mxu0 %v845
    %911 = vmatprep.subr.bf16.mxu0 %v848
    %912 = vmatpush1.bf16.msra.mxu0 %v847
    %913 = vmatprep.subr.bf16.mxu0 %v850
    %914 = vmatpush1.bf16.msra.mxu0 %v849
    %915 = vmatprep.subr.bf16.mxu0 %v852
    %916 = vmatpush1.bf16.msra.mxu0 %v851
    %917 = vmatprep.subr.bf16.mxu0 %v854
    %918 = vmatpush1.bf16.msra.mxu0 %v853
    %919 = vmatprep.subr.bf16.mxu0 %v856
    %920 = vmatpush1.bf16.msra.mxu0 %v855
    %921 = vmatprep.subr.bf16.mxu0 %v858
    %922 = vmatpush1.bf16.msra.mxu0 %v857
    %923 = vmatprep.subr.bf16.mxu0 %v860
    %924 = vmatpush1.bf16.msra.mxu0 %v859
    %925 = vmatprep.subr.bf16.mxu0 %v862
    %926 = vmatpush1.bf16.msra.mxu0 %v861
    %927 = vmatprep.mubr.bf16.mxu0 %v669
    %928 = vmatmul.mubr.bf16.gmra.mrb[0].mxu0 %v668
    %v929 = vpop.f32.mrb[0].mxu0
    %v930 = vadd.f32 %v730, %v929
    %v931 = vpop.f32.mrb[0].mxu0
    %v932 = vadd.f32 %v734, %v931
    %v933 = vpop.f32.mrb[0].mxu0
    %v934 = vadd.f32 %v730, %v933
    %v935 = vpop.f32.mrb[0].mxu0
    %v936 = vadd.f32 %v734, %v935
    %937 = vmatprep.mubr.bf16.mxu0 %v671
    %938 = vmatmul.mubr.bf16.gmra.mrb[0].mxu0 %v670
    %v939 = vpop.f32.mrb[0].mxu0
    %v940 = vadd.f32 %v730, %v939
    %v941 = vpop.f32.mrb[0].mxu0
    %v942 = vadd.f32 %v734, %v941
    %v943 = vpop.f32.mrb[0].mxu0
    %v944 = vadd.f32 %v730, %v943
    %v945 = vpop.f32.mrb[0].mxu0
    %v946 = vadd.f32 %v734, %v945
    %947 = vmatprep.mubr.bf16.mxu0 %v673
    %948 = vmatmul.mubr.bf16.gmra.mrb[0].mxu0 %v672
    %v949 = vpop.f32.mrb[0].mxu0
    %v950 = vadd.f32 %v730, %v949
    %v951 = vpop.f32.mrb[0].mxu0
    %v952 = vadd.f32 %v734, %v951
    %v953 = vpop.f32.mrb[0].mxu0
    %v954 = vadd.f32 %v730, %v953
    %v955 = vpop.f32.mrb[0].mxu0
    %v956 = vadd.f32 %v734, %v955
    %957 = vmatprep.mubr.bf16.mxu0 %v675
    %958 = vmatmul.mubr.bf16.gmra.mrb[0].mxu0 %v674
    %v959 = vpop.f32.mrb[0].mxu0
    %v960 = vadd.f32 %v730, %v959
    %v961 = vpop.f32.mrb[0].mxu0
    %v962 = vadd.f32 %v734, %v961
    %v963 = vpop.f32.mrb[0].mxu0
    %v964 = vadd.f32 %v730, %v963
    %v965 = vpop.f32.mrb[0].mxu0
    %v966 = vadd.f32 %v734, %v965
    %967 = vmatprep.mubr.bf16.mxu0 %v677
    %968 = vmatmul.mubr.bf16.gmra.mrb[0].mxu0 %v676
    %v969 = vpop.f32.mrb[0].mxu0
    %v970 = vadd.f32 %v730, %v969
    %v971 = vpop.f32.mrb[0].mxu0
    %v972 = vadd.f32 %v734, %v971
    %v973 = vpop.f32.mrb[0].mxu0
    %v974 = vadd.f32 %v730, %v973
    %v975 = vpop.f32.mrb[0].mxu0
    %v976 = vadd.f32 %v734, %v975
    %977 = vmatprep.mubr.bf16.mxu0 %v679
    %978 = vmatmul.mubr.bf16.gmra.mrb[0].mxu0 %v678
    %v979 = vpop.f32.mrb[0].mxu0
    %v980 = vadd.f32 %v730, %v979
    %v981 = vpop.f32.mrb[0].mxu0
    %v982 = vadd.f32 %v734, %v981
    %v983 = vpop.f32.mrb[0].mxu0
    %v984 = vadd.f32 %v730, %v983
    %v985 = vpop.f32.mrb[0].mxu0
    %v986 = vadd.f32 %v734, %v985
    %987 = vmatprep.mubr.bf16.mxu0 %v681
    %988 = vmatmul.mubr.bf16.gmra.mrb[0].mxu0 %v680
    %v989 = vpop.f32.mrb[0].mxu0
    %v990 = vadd.f32 %v730, %v989
    %v991 = vpop.f32.mrb[0].mxu0
    %v992 = vadd.f32 %v734, %v991
    %v993 = vpop.f32.mrb[0].mxu0
    %v994 = vadd.f32 %v730, %v993
    %v995 = vpop.f32.mrb[0].mxu0
    %v996 = vadd.f32 %v734, %v995
    %997 = vmatprep.mubr.bf16.mxu0 %v683
    %998 = vmatmul.mubr.bf16.gmra.mrb[0].mxu0 %v682
    %v999 = vpop.f32.mrb[0].mxu0
    %v1000 = vadd.f32 %v730, %v999
    %v1001 = vpop.f32.mrb[0].mxu0
    %v1002 = vadd.f32 %v734, %v1001
    %v1003 = vpop.f32.mrb[0].mxu0
    %v1004 = vadd.f32 %v730, %v1003
    %v1005 = vpop.f32.mrb[0].mxu0
    %v1006 = vadd.f32 %v734, %v1005
    %1007 = vdwg.mxu0
    %v1008 = vmax.f32 %v930, 0.0
    %v1009 = vmax.f32 %v932, 0.0
    %v1010 = vmax.f32 %v934, 0.0
    %v1011 = vmax.f32 %v936, 0.0
    %v1012 = vmax.f32 %v940, 0.0
    %v1013 = vmax.f32 %v942, 0.0
    %v1014 = vmax.f32 %v944, 0.0
    %v1015 = vmax.f32 %v946, 0.0
    %v1016 = vmax.f32 %v950, 0.0
    %v1017 = vmax.f32 %v952, 0.0
    %v1018 = vmax.f32 %v954, 0.0
    %v1019 = vmax.f32 %v956, 0.0
    %v1020 = vmax.f32 %v960, 0.0
    %v1021 = vmax.f32 %v962, 0.0
    %v1022 = vmax.f32 %v964, 0.0
    %v1023 = vmax.f32 %v966, 0.0
    %v1024 = vmax.f32 %v970, 0.0
    %v1025 = vmax.f32 %v972, 0.0
    %v1026 = vmax.f32 %v974, 0.0
    %v1027 = vmax.f32 %v976, 0.0
    %v1028 = vmax.f32 %v980, 0.0
    %v1029 = vmax.f32 %v982, 0.0
    %v1030 = vmax.f32 %v984, 0.0
    %v1031 = vmax.f32 %v986, 0.0
    %v1032 = vmax.f32 %v990, 0.0
    %v1033 = vmax.f32 %v992, 0.0
    %v1034 = vmax.f32 %v994, 0.0
    %v1035 = vmax.f32 %v996, 0.0
    %v1036 = vmax.f32 %v1000, 0.0
    %v1037 = vmax.f32 %v1002, 0.0
    %v1038 = vmax.f32 %v1004, 0.0
    %v1039 = vmax.f32 %v1006, 0.0
    %v1040 = vpack.c.bf16 %v1010, %v1008
    %v1041 = vpack.c.bf16 %v1011, %v1009
    %v1042 = vpack.c.bf16 %v1014, %v1012
    %v1043 = vpack.c.bf16 %v1015, %v1013
    %v1044 = vpack.c.bf16 %v1018, %v1016
    %v1045 = vpack.c.bf16 %v1019, %v1017
    %v1046 = vpack.c.bf16 %v1022, %v1020
    %v1047 = vpack.c.bf16 %v1023, %v1021
    %v1048 = vpack.c.bf16 %v1026, %v1024
    %v1049 = vpack.c.bf16 %v1027, %v1025
    %v1050 = vpack.c.bf16 %v1030, %v1028
    %v1051 = vpack.c.bf16 %v1031, %v1029
    %v1052 = vpack.c.bf16 %v1034, %v1032
    %v1053 = vpack.c.bf16 %v1035, %v1033
    %v1054 = vpack.c.bf16 %v1038, %v1036
    %v1055 = vpack.c.bf16 %v1039, %v1037
    %v1056 = vld [vmem:[%s4] sm:$0x3]
    %s1057 = sld [smem:[#allocation2]]
    %v1058 = vstv %s1057
    %v1061 = vunpack.c.l.s4 1966171168
    %v1062 = vunpack.c.0.s8 %v1061
    %v1063 = vlaneseq
    %v1064 = vshrl.u32 %v1063, 7
    %v1065 = vsub.s32 %v1062, %v1064
    %v1066 = vrot.slane %v1056, %v1065
    %v1067 = vcombine.high %v1066, %v1066
    %v1069 = vunpack.c.l.s4 1966171168
    %v1070 = vunpack.c.0.s8 %v1069
    %v1071 = vlaneseq
    %v1072 = vshrl.u32 %v1071, 7
    %v1073 = vsub.s32 %v1070, %v1072
    %v1074 = vrot.slane %v1066, %v1073
    %v1076 = vunpack.c.l.s4 1966171168
    %v1077 = vunpack.c.0.s8 %v1076
    %v1078 = vlaneseq
    %v1079 = vshrl.u32 %v1078, 7
    %v1080 = vsub.s32 %v1077, %v1079
    %v1081 = vrot.slane %v1067, %v1080
    %1084 = vmatprep.subr.bf16.mxu0 %v1041
    %1085 = vmatpush1.bf16.xpose.msra.mxu0 %v1040
    %1086 = vmatprep.subr.bf16.mxu0 %v1043
    %1087 = vmatpush1.bf16.xpose.msra.mxu0 %v1042
    %1088 = vmatprep.subr.bf16.mxu0 %v1045
    %1089 = vmatpush1.bf16.xpose.msra.mxu0 %v1044
    %1090 = vmatprep.subr.bf16.mxu0 %v1047
    %1091 = vmatpush1.bf16.xpose.msra.mxu0 %v1046
    %1092 = vmatprep.subr.bf16.mxu0 %v1049
    %1093 = vmatpush1.bf16.xpose.msra.mxu0 %v1048
    %1094 = vmatprep.subr.bf16.mxu0 %v1051
    %1095 = vmatpush1.bf16.xpose.msra.mxu0 %v1050
    %1096 = vmatprep.subr.bf16.mxu0 %v1053
    %1097 = vmatpush1.bf16.xpose.msra.mxu0 %v1052
    %1098 = vmatprep.subr.bf16.mxu0 %v1055
    %1099 = vmatpush1.bf16.xpose.msra.mxu0 %v1054
    %1100 = vmatprep.subr.bf16.mxu0 0
    %1101 = vmatpush1.bf16.xpose.msra.mxu0 0
    %1102 = vmatprep.subr.bf16.mxu0 0
    %1103 = vmatpush1.bf16.xpose.msra.mxu0 0
    %1104 = vmatprep.subr.bf16.mxu0 0
    %1105 = vmatpush1.bf16.xpose.msra.mxu0 0
    %1106 = vmatprep.subr.bf16.mxu0 0
    %1107 = vmatpush1.bf16.xpose.msra.mxu0 0
    %1108 = vmatprep.subr.bf16.mxu0 0
    %1109 = vmatpush1.bf16.xpose.msra.mxu0 0
    %1110 = vmatprep.subr.bf16.mxu0 0
    %1111 = vmatpush1.bf16.xpose.msra.mxu0 0
    %1112 = vmatprep.subr.bf16.mxu0 0
    %1113 = vmatpush1.bf16.xpose.msra.mxu0 0
    %1114 = vmatprep.subr.bf16.mxu0 0
    %1115 = vmatpush1.bf16.xpose.msra.mxu0 0
    %1116 = vmatprep.mubr.bf16.mxu0 %v1081
    %1117 = vmatmul.mubr.bf16.gmra.mrb[0].mxu0 %v1074
    %v1118 = vpop.f32.mrb[0].mxu0
    %v1119 = vadd.f32 %v1058, %v1118
    %v1120 = vpop.f32.mrb[0].mxu0
    %v1121 = vpop.f32.mrb[0].mxu0
    %v1122 = vpop.f32.mrb[0].mxu0
    %1123 = vdwg.mxu0
    %1124 = vst [vmem:[%s6] sm:$0x1] %v1119
    // Predicated region
    $region30: #{qnetwork_forward.1} parent=1 // pred_check
      _
    $region31: #{qnetwork_forward.1} parent=1 // pred_check_branch
      %1126 = sbr.rel (0) target = $region33
    $region32: #{qnetwork_forward.1} parent=1 // pred_region
      _
    $region33: #{qnetwork_forward.1} parent=1 // pred_fallthru
      _
    // Predicated region
    $region34: #{qnetwork_forward.1} parent=1 // pred_check
      _
    $region35: #{qnetwork_forward.1} parent=1 // pred_check_branch
      %1128 = sbr.rel (0) target = $region37
    $region36: #{qnetwork_forward.1} parent=1 // pred_region
      _
    $region37: #{qnetwork_forward.1} parent=1 // pred_fallthru
      _
    %1129 = vsyncpa [#allocation4], 1

</llo_original>
